<compile_context>
chip_gen: v7x
topology: tpu7x:2x2x1
jax: 0.10.0
libtpu: 0.0.40
codegen_flags: <defaults>
</compile_context>

<pallas_src>
import jax
import jax.numpy as jnp
from jax.experimental import pallas as pl
from jax.experimental.pallas import tpu as pltpu


def _round_up(x: int, m: int) -> int:
    return ((x + m - 1) // m) * m


def distmult_kernel(e1_ref, rel_ref, wt_ref, out_ref):
    # (tb, D) * (tb, D) in f32 on the VPU, cast to bf16 for the MXU,
    # then (tb, D) @ (D, te) -> (tb, te) with f32 accumulation.
    x = (e1_ref[...] * rel_ref[...]).astype(wt_ref.dtype)
    out_ref[...] = jnp.dot(x, wt_ref[...], preferred_element_type=jnp.float32)


def distmult_forward(e1_idx, rel_idx, emb_e_w, emb_rel_w, *, tb=128, te=1024):
    """Embedding lookup + squeeze in JAX, tiled Pallas kernel for the hot path.

    emb_e_w: [E, D] float32 entity table (also the scoring matrix).
    emb_rel_w: [R, D] float32 relation table.
    Returns pred: [B, E] float32.
    """
    B = e1_idx.shape[0]
    E, D = emb_e_w.shape

    # Embedding lookups: [B, 1] -> [B, 1, D] -> squeeze -> [B, D]
    e1_emb = jnp.squeeze(emb_e_w[e1_idx], axis=1).astype(jnp.float32)
    rel_emb = jnp.squeeze(emb_rel_w[rel_idx], axis=1).astype(jnp.float32)
    # TODO(synk): torch.nn.Dropout(p=0.05) is identity in eval mode; training-mode
    # random masking is not applied here.

    # Entity table, pre-transposed to [D, E] and cast to bf16 so the kernel
    # streams half the bytes and the output (entity) axis lands lane-dense.
    # TODO(synk): for serving, do this transpose/cast once at init, not per call.
    wt = emb_e_w.T.astype(jnp.bfloat16)  # [D, E]

    # Effective tile sizes (tb multiple of 8, te multiple of 128), clamped so
    # tiny demo shapes still work, and pad B / E up to whole tiles.
    tb_eff = min(_round_up(B, 8), _round_up(tb, 8))
    te_eff = min(_round_up(E, 128), _round_up(te, 128))
    B_pad = _round_up(B, tb_eff)
    E_pad = _round_up(E, te_eff)

    if B_pad != B:
        e1_emb = jnp.pad(e1_emb, ((0, B_pad - B), (0, 0)))
        rel_emb = jnp.pad(rel_emb, ((0, B_pad - B), (0, 0)))
    if E_pad != E:
        wt = jnp.pad(wt, ((0, 0), (0, E_pad - E)))

    grid = (B_pad // tb_eff, E_pad // te_eff)

    pred = pl.pallas_call(
        distmult_kernel,
        out_shape=jax.ShapeDtypeStruct((B_pad, E_pad), jnp.float32),
        grid=grid,
        in_specs=[
            pl.BlockSpec((tb_eff, D), lambda i, j: (i, 0)),   # e1 tile (reused over j)
            pl.BlockSpec((tb_eff, D), lambda i, j: (i, 0)),   # rel tile (reused over j)
            pl.BlockSpec((D, te_eff), lambda i, j: (0, j)),   # streamed weight tile
        ],
        out_specs=pl.BlockSpec((tb_eff, te_eff), lambda i, j: (i, j)),
        compiler_params=pltpu.CompilerParams(
            dimension_semantics=("parallel", "parallel"),
        ),
        cost_estimate=pl.CostEstimate(
            flops=2 * B_pad * E_pad * D,
            transcendentals=0,
            bytes_accessed=(D * E_pad * 2            # bf16 weight stream
                            + 2 * B_pad * D * 4      # e1 / rel tiles
                            + B_pad * E_pad * 4),    # f32 output
        ),
    )(e1_emb, rel_emb, wt)

    return pred[:B, :E]


def init_params(key, num_entities, num_relations, embedding_dim):
    """Deterministic xavier_normal_ init; row 0 zeroed (padding_idx=0)."""
    k_e, k_r = jax.random.split(key)
    std_e = (2.0 / (num_entities + embedding_dim)) ** 0.5
    std_r = (2.0 / (num_relations + embedding_dim)) ** 0.5
    emb_e_w = std_e * jax.random.normal(k_e, (num_entities, embedding_dim), jnp.float32)
    emb_rel_w = std_r * jax.random.normal(k_r, (num_relations, embedding_dim), jnp.float32)
    emb_e_w = emb_e_w.at[0].set(0.0)      # padding_idx=0
    emb_rel_w = emb_rel_w.at[0].set(0.0)  # padding_idx=0
    return emb_e_w, emb_rel_w


if __name__ == "__main__":
    # Small-but-gridded synthetic shapes consistent with the module's forward.
    B = 8       # batch of (e1, rel) index pairs, each shaped [B, 1]
    D = 128     # embedding_dim
    E = 4096    # num_entities  (exercises the entity-tile grid: 4 tiles of 1024)
    R = 16      # num_relations

    key = jax.random.PRNGKey(0)
    k_param, k_e1, k_rel = jax.random.split(key, 3)

    emb_e_w, emb_rel_w = init_params(k_param, E, R, D)

    e1 = jax.random.randint(k_e1, (B, 1), 0, E, dtype=jnp.int32)
    rel = jax.random.randint(k_rel, (B, 1), 0, R, dtype=jnp.int32)

    pred = distmult_forward(e1, rel, emb_e_w, emb_rel_w)
    jax.block_until_ready(pred)
    assert pred.shape == (B, E)

    # Reference check 1: against the same bf16-quantized operands in f32
    # (isolates accumulation-order differences only) -> tight tolerance.
    e1_emb = jnp.squeeze(emb_e_w[e1], axis=1)
    rel_emb = jnp.squeeze(emb_rel_w[rel], axis=1)
    xq = (e1_emb * rel_emb).astype(jnp.bfloat16).astype(jnp.float32)
    wq = emb_e_w.T.astype(jnp.bfloat16).astype(jnp.float32)
    ref_q = xq @ wq
    assert jnp.allclose(pred, ref_q, atol=1e-4, rtol=1e-4), (
        float(jnp.max(jnp.abs(pred - ref_q))))

    # Reference check 2: against the full-f32 PyTorch semantics with a loose
    # tolerance that covers the bf16 weight-streaming quantization.
    ref_f32 = (e1_emb * rel_emb) @ emb_e_w.T
    assert jnp.allclose(pred, ref_f32, atol=5e-3, rtol=5e-2), (
        float(jnp.max(jnp.abs(pred - ref_f32))))

    print("KERNEL_OK")
</pallas_src>

<mosaic_0001>
module attributes {stable_mosaic.version = 11 : i64} {
  func.func @distmult_kernel(%arg0: i32, %arg1: i32, %arg2: memref<8x128xf32, #tpu.memory_space<vmem>>, %arg3: memref<8x128xf32, #tpu.memory_space<vmem>>, %arg4: memref<128x1024xbf16, #tpu.memory_space<vmem>>, %arg5: memref<8x1024xf32, #tpu.memory_space<vmem>>) attributes {dimension_semantics = [#tpu.dimension_semantics<parallel>, #tpu.dimension_semantics<parallel>], iteration_bounds = array<i64: 1, 4>, scalar_prefetch = 0 : i64, scratch_operands = 0 : i64, tpu.core_type = #tpu.core_type<tc>, window_params = [{transform_indices = @transform_0, window_bounds = array<i64: 8, 128>}, {transform_indices = @transform_1, window_bounds = array<i64: 8, 128>}, {transform_indices = @transform_2, window_bounds = array<i64: 128, 1024>}, {transform_indices = @transform_3, window_bounds = array<i64: 8, 1024>}]} {
    %c0 = arith.constant 0 : index
    %c0_0 = arith.constant 0 : index
    %0 = vector.load %arg2[%c0, %c0_0] : memref<8x128xf32, #tpu.memory_space<vmem>>, vector<8x128xf32>
    %c0_1 = arith.constant 0 : index
    %c0_2 = arith.constant 0 : index
    %1 = vector.load %arg3[%c0_1, %c0_2] : memref<8x128xf32, #tpu.memory_space<vmem>>, vector<8x128xf32>
    %2 = arith.mulf %0, %1 : vector<8x128xf32>
    %3 = arith.truncf %2 : vector<8x128xf32> to vector<8x128xbf16>
    %c0_3 = arith.constant 0 : index
    %c0_4 = arith.constant 0 : index
    %4 = vector.load %arg4[%c0_3, %c0_4] : memref<128x1024xbf16, #tpu.memory_space<vmem>>, vector<128x1024xbf16>
    %cst = arith.constant dense<0.000000e+00> : vector<8x1024xf32>
    %5 = tpu.matmul %3, %4, %cst {dimension_numbers = #tpu.dot_dimension_numbers<[1], [0], [0], [1], [0, 0, 1, 1], [], []>} : vector<8x128xbf16>, vector<128x1024xbf16>, vector<8x1024xf32> -> vector<8x1024xf32>
    %c0_5 = arith.constant 0 : index
    %c0_6 = arith.constant 0 : index
    %6 = vector.load %arg5[%c0_5, %c0_6] : memref<8x1024xf32, #tpu.memory_space<vmem>>, vector<8x1024xf32>
    tpu.vector_store %arg5[%c0_5, %c0_6], %5 {strides = array<i32>} : memref<8x1024xf32, #tpu.memory_space<vmem>>, vector<8x1024xf32>,
    return
  }
  func.func @transform_0(%arg0: i32, %arg1: i32) -> (i32, i32) {
    %c0_i32 = arith.constant 0 : i32
    %c0_i32_0 = arith.constant 0 : i32
    return %arg0, %c0_i32 : i32, i32
  }
  func.func @transform_1(%arg0: i32, %arg1: i32) -> (i32, i32) {
    %c0_i32 = arith.constant 0 : i32
    %c0_i32_0 = arith.constant 0 : i32
    return %arg0, %c0_i32 : i32, i32
  }
  func.func @transform_2(%arg0: i32, %arg1: i32) -> (i32, i32) {
    %c0_i32 = arith.constant 0 : i32
    %c0_i32_0 = arith.constant 0 : i32
    return %c0_i32, %arg1 : i32, i32
  }
  func.func @transform_3(%arg0: i32, %arg1: i32) -> (i32, i32) {
    %c0_i32 = arith.constant 0 : i32
    return %arg0, %arg1 : i32, i32
  }
}

</mosaic_0001>

<llo_original>
// kernel: tpu_custom_call.1
$region0: #{tpu_custom_call.1}
  #allocation0 [shape = 'u32[]', space=smem, size = 0x4, offset = 0x4, fixed_abs, tag = 'smem constant byte address 0x4 - core index']
  #allocation1 [shape = 'u32[144,128]{1,0:T(1,128)}', space=vmem, size = 0x12000, scoped, tag = 'internal scratch']
  %s0 = inlined_call_operand.hbm [shape: f32[8,128], index: 0, kind: input, shape index: {}]
  %s1 = inlined_call_operand.hbm [shape: f32[8,128], index: 1, kind: input, shape index: {}]
  %s2 = inlined_call_operand.hbm [shape: bf16[128,4096], index: 2, kind: input, shape index: {}]
  %s3 = inlined_call_operand.hbm [shape: f32[8,4096], index: 3, kind: output, shape index: {}]
  %s4 = sld [smem:[#allocation0]]
  $region57: #{tpu_custom_call.1} parent=0
    _
  %s6 = ssub.s32 1, %s4
  %s7 = scalar_select 0, %s6, %s4
  $region1: #{tpu_custom_call.1} parent=0
    #allocation2 [shape = 'u8[4096]{0}', space=vmem, size = 0x1000, scoped, tag = 'input window, operand 0, single buffered']
    #allocation3 [shape = 's32[2]{0}', space=sflag, size = 0x8, scoped, tag = 'scoped memory for tpu_custom_call.1']
    #allocation4 [shape = 's32[2]{0}', space=sflag, size = 0x8, scoped, tag = 'scoped memory for tpu_custom_call.1']
    #allocation5 [shape = 'u8[4096]{0}', space=vmem, size = 0x1000, scoped, tag = 'input window, operand 1, single buffered']
    #allocation6 [shape = 's32[1]{0}', space=sflag, size = 0x4, scoped, tag = 'scoped memory for tpu_custom_call.1']
    #allocation7 [shape = 'u8[524288]{0}', space=vmem, size = 0x80000, scoped, tag = 'input window, operand 2']
    #allocation8 [shape = 'u8[65536]{0}', space=vmem, size = 0x10000, scoped, tag = 'output window, operand 0']
    %8 = vsyncpa [#allocation3], 0
    %9 = vsyncpa [#allocation6], 0
    %10 = vsyncpa [#allocation4], 0
    %s11 = scalar_lea.sflag [#allocation4], 1
    %12 = vsyncpa %s11, 0
    loop: start=0, step=1, limit=6
    $region2: #{tpu_custom_call.1} parent=1 // loop_pre_header
      _
    $region3: #{tpu_custom_call.1} parent=1 // loop_header
      %s14 = sphi 0, %s18
      %p15 = scmp.ge.s32.totalorder %s14, 6
      %s21 = sphi 0, %s33
      %s22 = sphi 0, %s29
      %s23 = sphi 0, %s21
      %s24 = sphi 0, %s22
      %s25 = sphi 0, %s23
      %s26 = sphi 0, %s24
      %s36 = sphi 0, %s38
      %s39 = sphi 0, %s36
      %s40 = sphi 0, %s39
      %s56 = sphi 0, %s40
      %s62 = sphi 0, %s64
      %s65 = sphi 0, %s62
      %s66 = sphi 0, %s65
      %s82 = sphi 0, %s66
      %s88 = sphi 0, %s90
      %s91 = sphi 0, %s88
      %s92 = sphi 0, %s91
      %s108 = sphi 0, %s92
      %s116 = sphi 0, %s118
      %s119 = sphi 0, %s116
      %s120 = sphi 0, %s119
      %s136 = sphi 0, %s120
    $region4: #{tpu_custom_call.1} parent=1 // loop_header_branch
      %17 = sbr.rel (%p15) target = $region8
    $region5: #{tpu_custom_call.1} parent=1 // loop_body
      %s19 = ssub.s32 %s14, 1
      %s20 = ssub.s32 %s14, 2
      %s27 = sadd.s32 1, %s22
      %p28 = scmp.ge.s32.totalorder %s27, 4
      %s29 = scalar_select %p28, 0, %s27
      %s30 = sadd.s32 1, %s21
      %s31 = scalar_select %p28, %s30, %s21
      %p32 = scmp.ge.s32.totalorder %s31, 1
      %s33 = scalar_select %p32, 0, %s31
      %s34 = ssub.s32 %s21, %s33
      %p35 = scmp.eq.s32.totalorder %s34, 0
      %s37 = sadd.s32 %s36, 1
      %s38 = scalar_select %p35, %s36, %s37
      %p41 = pneg %p35
      %p42 = scmp.eq.s32.totalorder %s14, 3
      %p43 = por %p41, %p42
      %p44 = scmp.ne.s32.totalorder %s36, %s39
      %p45 = scmp.eq.s32.totalorder %s14, 0
      %p46 = por %p44, %p45
      %p47 = scmp.ne.s32.totalorder %s36, %s39
      %p48 = scmp.eq.s32.totalorder %s19, 3
      %p49 = por %p47, %p48
      %p50 = scmp.ne.s32.totalorder %s39, %s40
      %p51 = scmp.eq.s32.totalorder %s19, 0
      %p52 = por %p50, %p51
      %p53 = scmp.ne.s32.totalorder %s39, %s40
      %p54 = scmp.eq.s32.totalorder %s20, 3
      %p55 = por %p53, %p54
      %p57 = scmp.ne.s32.totalorder %s40, %s56
      %p58 = scmp.eq.s32.totalorder %s20, 0
      %p59 = por %p57, %p58
      %s60 = ssub.s32 %s21, %s33
      %p61 = scmp.eq.s32.totalorder %s60, 0
      %s63 = sadd.s32 %s62, 1
      %s64 = scalar_select %p61, %s62, %s63
      %p67 = pneg %p61
      %p68 = scmp.eq.s32.totalorder %s14, 3
      %p69 = por %p67, %p68
      %p70 = scmp.ne.s32.totalorder %s62, %s65
      %p71 = scmp.eq.s32.totalorder %s14, 0
      %p72 = por %p70, %p71
      %p73 = scmp.ne.s32.totalorder %s62, %s65
      %p74 = scmp.eq.s32.totalorder %s19, 3
      %p75 = por %p73, %p74
      %p76 = scmp.ne.s32.totalorder %s65, %s66
      %p77 = scmp.eq.s32.totalorder %s19, 0
      %p78 = por %p76, %p77
      %p79 = scmp.ne.s32.totalorder %s65, %s66
      %p80 = scmp.eq.s32.totalorder %s20, 3
      %p81 = por %p79, %p80
      %p83 = scmp.ne.s32.totalorder %s66, %s82
      %p84 = scmp.eq.s32.totalorder %s20, 0
      %p85 = por %p83, %p84
      %s86 = ssub.s32 %s22, %s29
      %p87 = scmp.eq.s32.totalorder %s86, 0
      %s89 = sadd.s32 %s88, 1
      %s90 = scalar_select %p87, %s88, %s89
      %p93 = pneg %p87
      %p94 = scmp.eq.s32.totalorder %s14, 3
      %p95 = por %p93, %p94
      %p96 = scmp.ne.s32.totalorder %s88, %s91
      %p97 = scmp.eq.s32.totalorder %s14, 0
      %p98 = por %p96, %p97
      %p99 = scmp.ne.s32.totalorder %s88, %s91
      %p100 = scmp.eq.s32.totalorder %s19, 3
      %p101 = por %p99, %p100
      %p102 = scmp.ne.s32.totalorder %s91, %s92
      %p103 = scmp.eq.s32.totalorder %s19, 0
      %p104 = por %p102, %p103
      %p105 = scmp.ne.s32.totalorder %s91, %s92
      %p106 = scmp.eq.s32.totalorder %s20, 3
      %p107 = por %p105, %p106
      %p109 = scmp.ne.s32.totalorder %s92, %s108
      %p110 = scmp.eq.s32.totalorder %s20, 0
      %p111 = por %p109, %p110
      %s112 = ssub.s32 %s21, %s33
      %s113 = ssub.s32 %s22, %s29
      %s114 = sor.u32 %s112, %s113
      %p115 = scmp.eq.s32.totalorder %s114, 0
      %s117 = sadd.s32 %s116, 1
      %s118 = scalar_select %p115, %s116, %s117
      %p121 = pneg %p115
      %p122 = scmp.eq.s32.totalorder %s14, 3
      %p123 = por %p121, %p122
      %p124 = scmp.ne.s32.totalorder %s116, %s119
      %p125 = scmp.eq.s32.totalorder %s14, 0
      %p126 = por %p124, %p125
      %p127 = scmp.ne.s32.totalorder %s116, %s119
      %p128 = scmp.eq.s32.totalorder %s19, 3
      %p129 = por %p127, %p128
      %p130 = scmp.ne.s32.totalorder %s119, %s120
      %p131 = scmp.eq.s32.totalorder %s19, 0
      %p132 = por %p130, %p131
      %p133 = scmp.ne.s32.totalorder %s119, %s120
      %p134 = scmp.eq.s32.totalorder %s20, 3
      %p135 = por %p133, %p134
      %p137 = scmp.ne.s32.totalorder %s120, %s136
      %p138 = scmp.eq.s32.totalorder %s20, 0
      %p139 = por %p137, %p138
      %p140 = scmp.le.s32.totalorder 1, %s14
      %p141 = scmp.lt.s32.totalorder %s14, 5
      %p142 = pnand %p140, %p141
      %p143 = pneg %p142
      // Predicated region
      $region9: #{tpu_custom_call.1} parent=5 // pred_check
        _
      $region10: #{tpu_custom_call.1} parent=5 // pred_check_branch
        %145 = sbr.rel (%p142) target = $region12
      $region11: #{tpu_custom_call.1} parent=5 // pred_region
        %s146 = ssub.s32 %s14, 1
        // Predicated region
        $region13: #{tpu_custom_call.1} parent=11 // pred_check
          %p147 = pneg %p52
        $region14: #{tpu_custom_call.1} parent=11 // pred_check_branch
          %149 = sbr.rel (%p147) target = $region16
        $region15: #{tpu_custom_call.1} parent=11 // pred_region
          %s151 = ssub.s32 128, 128
          %152 = vsyncadd [#allocation3], %s151
          %s153 = smul.addr %s23, 128
          %s154 = scalar_lea.hbm %s0, %s153
          %s156 = sshll.u32 [#allocation2], 4
          %s157 = int_to_ptr.vmem [resolvable:$true] %s156
          %159 = dma.hbm_to_vmem [thread:$0]  %s154, 128, %s157, [#allocation3]
        $region16: #{tpu_custom_call.1} parent=11 // pred_fallthru
          _
        // Predicated region
        $region17: #{tpu_custom_call.1} parent=11 // pred_check
          %p160 = pneg %p78
        $region18: #{tpu_custom_call.1} parent=11 // pred_check_branch
          %162 = sbr.rel (%p160) target = $region20
        $region19: #{tpu_custom_call.1} parent=11 // pred_region
          %s164 = ssub.s32 128, 128
          %165 = vsyncadd [#allocation6], %s164
          %s166 = smul.addr %s23, 128
          %s167 = scalar_lea.hbm %s1, %s166
          %s169 = sshll.u32 [#allocation5], 4
          %s170 = int_to_ptr.vmem [resolvable:$true] %s169
          %172 = dma.hbm_to_vmem [thread:$0]  %s167, 128, %s170, [#allocation6]
        $region20: #{tpu_custom_call.1} parent=11 // pred_fallthru
          _
      $region12: #{tpu_custom_call.1} parent=5 // pred_fallthru
        _
      %p173 = scmp.lt.s32.totalorder %s14, 4
      // Predicated region
      $region21: #{tpu_custom_call.1} parent=5 // pred_check
        %p174 = pneg %p173
      $region22: #{tpu_custom_call.1} parent=5 // pred_check_branch
        %176 = sbr.rel (%p174) target = $region24
      $region23: #{tpu_custom_call.1} parent=5 // pred_region
        // Predicated region
        $region25: #{tpu_custom_call.1} parent=23 // pred_check
          %p177 = pneg %p98
        $region26: #{tpu_custom_call.1} parent=23 // pred_check_branch
          %179 = sbr.rel (%p177) target = $region28
        $region27: #{tpu_custom_call.1} parent=23 // pred_region
          %s180 = sand.u32 %s14, 1
          %s181 = scalar_lea.sflag [#allocation3], %s180
          %s182 = sand.u32 %s88, 1
          %s183 = smul.addr %s182, 512
          %s184 = scalar_lea.vmem [#allocation7], %s183
          %s185 = smul.u32 8, %s22
          %s187 = ssub.s32 8192, 8192
          %188 = vsyncadd %s181, %s187
          %s189 = smul.addr %s185, 64
          %s190 = scalar_lea.hbm %s2, %s189
          %s191 = sshll.u32 %s184, 4
          %s192 = int_to_ptr.vmem [resolvable:$true] %s191
          %197 = dma.hbm_to_vmem [thread:$0]  %s190, 8192, %s192, %s181, 2048, 512, 32
        $region28: #{tpu_custom_call.1} parent=23 // pred_fallthru
          _
      $region24: #{tpu_custom_call.1} parent=5 // pred_fallthru
        _
      %p198 = scmp.le.s32.totalorder 1, %s14
      %p199 = scmp.lt.s32.totalorder %s14, 5
      %p200 = pnand %p198, %p199
      %p201 = pneg %p200
      // Predicated region
      $region29: #{tpu_custom_call.1} parent=5 // pred_check
        _
      $region30: #{tpu_custom_call.1} parent=5 // pred_check_branch
        %203 = sbr.rel (%p200) target = $region32
      $region31: #{tpu_custom_call.1} parent=5 // pred_region
        %s204 = ssub.s32 %s14, 1
        // Predicated region
        $region33: #{tpu_custom_call.1} parent=31 // pred_check
          %p205 = pneg %p52
        $region34: #{tpu_custom_call.1} parent=31 // pred_check_branch
          %207 = sbr.rel (%p205) target = $region36
        $region35: #{tpu_custom_call.1} parent=31 // pred_region
          %208 = dma.done [#allocation3], 128
        $region36: #{tpu_custom_call.1} parent=31 // pred_fallthru
          _
        // Predicated region
        $region37: #{tpu_custom_call.1} parent=31 // pred_check
          %p209 = pneg %p78
        $region38: #{tpu_custom_call.1} parent=31 // pred_check_branch
          %211 = sbr.rel (%p209) target = $region40
        $region39: #{tpu_custom_call.1} parent=31 // pred_region
          %212 = dma.done [#allocation6], 128
        $region40: #{tpu_custom_call.1} parent=31 // pred_fallthru
          _
        %s213 = sand.u32 %s19, 1
        %s214 = scalar_lea.sflag [#allocation3], %s213
        %s215 = sand.u32 %s91, 1
        %s216 = smul.addr %s215, 512
        %s217 = scalar_lea.vmem [#allocation7], %s216
        // Predicated region
        $region41: #{tpu_custom_call.1} parent=31 // pred_check
          %p218 = pneg %p104
        $region42: #{tpu_custom_call.1} parent=31 // pred_check_branch
          %220 = sbr.rel (%p218) target = $region44
        $region43: #{tpu_custom_call.1} parent=31 // pred_region
          %221 = dma.done %s214, 8192
        $region44: #{tpu_custom_call.1} parent=31 // pred_fallthru
          _
        %p222 = pneg %p52
        %p223 = pneg %p49
        %p224 = pneg %p78
        %p225 = pneg %p75
        %s226 = sand.u32 %s19, 1
        %s227 = scalar_lea.sflag [#allocation3], %s226
        %s228 = sand.u32 %s91, 1
        %s229 = smul.addr %s228, 512
        %s230 = scalar_lea.vmem [#allocation7], %s229
        %p231 = pneg %p104
        %p232 = pneg %p101
        %p233 = pneg %p132
        %p234 = pneg %p129
        %s235 = sand.u32 %s119, 1
        %s236 = scalar_lea.sflag [#allocation4], %s235
        %s237 = sand.u32 %s119, 1
        %s238 = smul.addr %s237, 64
        %s239 = scalar_lea.vmem [#allocation8], %s238
        %s240 = smul.u32 8, %s24
        %s241 = smul.u32 8, %s24
        %v243 = vld [vmem:[#allocation2] sm:$0xff]
        %v244 = vld [vmem:[#allocation5] sm:$0xff]
        %v245 = vmul.f32 %v243, %v244
        %v246 = vpack.c.bf16 %v245, %v245
        %v247 = vld [vmem:[%s217] sm:$0xff]
        %v248 = vld [vmem:[%s217 + $0x8] sm:$0xff]
        %v249 = vld [vmem:[%s217 + $0x10] sm:$0xff]
        %v250 = vld [vmem:[%s217 + $0x18] sm:$0xff]
        %v251 = vld [vmem:[%s217 + $0x20] sm:$0xff]
        %v252 = vld [vmem:[%s217 + $0x28] sm:$0xff]
        %v253 = vld [vmem:[%s217 + $0x30] sm:$0xff]
        %v254 = vld [vmem:[%s217 + $0x38] sm:$0xff]
        %v255 = vld [vmem:[%s217 + $0x40] sm:$0xff]
        %v256 = vld [vmem:[%s217 + $0x48] sm:$0xff]
        %v257 = vld [vmem:[%s217 + $0x50] sm:$0xff]
        %v258 = vld [vmem:[%s217 + $0x58] sm:$0xff]
        %v259 = vld [vmem:[%s217 + $0x60] sm:$0xff]
        %v260 = vld [vmem:[%s217 + $0x68] sm:$0xff]
        %v261 = vld [vmem:[%s217 + $0x70] sm:$0xff]
        %v262 = vld [vmem:[%s217 + $0x78] sm:$0xff]
        %v263 = vld [vmem:[%s217 + $0x80] sm:$0xff]
        %v264 = vld [vmem:[%s217 + $0x88] sm:$0xff]
        %v265 = vld [vmem:[%s217 + $0x90] sm:$0xff]
        %v266 = vld [vmem:[%s217 + $0x98] sm:$0xff]
        %v267 = vld [vmem:[%s217 + $0xa0] sm:$0xff]
        %v268 = vld [vmem:[%s217 + $0xa8] sm:$0xff]
        %v269 = vld [vmem:[%s217 + $0xb0] sm:$0xff]
        %v270 = vld [vmem:[%s217 + $0xb8] sm:$0xff]
        %v271 = vld [vmem:[%s217 + $0xc0] sm:$0xff]
        %v272 = vld [vmem:[%s217 + $0xc8] sm:$0xff]
        %v273 = vld [vmem:[%s217 + $0xd0] sm:$0xff]
        %v274 = vld [vmem:[%s217 + $0xd8] sm:$0xff]
        %v275 = vld [vmem:[%s217 + $0xe0] sm:$0xff]
        %v276 = vld [vmem:[%s217 + $0xe8] sm:$0xff]
        %v277 = vld [vmem:[%s217 + $0xf0] sm:$0xff]
        %v278 = vld [vmem:[%s217 + $0xf8] sm:$0xff]
        %v279 = vld [vmem:[%s217 + $0x100] sm:$0xff]
        %v280 = vld [vmem:[%s217 + $0x108] sm:$0xff]
        %v281 = vld [vmem:[%s217 + $0x110] sm:$0xff]
        %v282 = vld [vmem:[%s217 + $0x118] sm:$0xff]
        %v283 = vld [vmem:[%s217 + $0x120] sm:$0xff]
        %v284 = vld [vmem:[%s217 + $0x128] sm:$0xff]
        %v285 = vld [vmem:[%s217 + $0x130] sm:$0xff]
        %v286 = vld [vmem:[%s217 + $0x138] sm:$0xff]
        %v287 = vld [vmem:[%s217 + $0x140] sm:$0xff]
        %v288 = vld [vmem:[%s217 + $0x148] sm:$0xff]
        %v289 = vld [vmem:[%s217 + $0x150] sm:$0xff]
        %v290 = vld [vmem:[%s217 + $0x158] sm:$0xff]
        %v291 = vld [vmem:[%s217 + $0x160] sm:$0xff]
        %v292 = vld [vmem:[%s217 + $0x168] sm:$0xff]
        %v293 = vld [vmem:[%s217 + $0x170] sm:$0xff]
        %v294 = vld [vmem:[%s217 + $0x178] sm:$0xff]
        %v295 = vld [vmem:[%s217 + $0x180] sm:$0xff]
        %v296 = vld [vmem:[%s217 + $0x188] sm:$0xff]
        %v297 = vld [vmem:[%s217 + $0x190] sm:$0xff]
        %v298 = vld [vmem:[%s217 + $0x198] sm:$0xff]
        %v299 = vld [vmem:[%s217 + $0x1a0] sm:$0xff]
        %v300 = vld [vmem:[%s217 + $0x1a8] sm:$0xff]
        %v301 = vld [vmem:[%s217 + $0x1b0] sm:$0xff]
        %v302 = vld [vmem:[%s217 + $0x1b8] sm:$0xff]
        %v303 = vld [vmem:[%s217 + $0x1c0] sm:$0xff]
        %v304 = vld [vmem:[%s217 + $0x1c8] sm:$0xff]
        %v305 = vld [vmem:[%s217 + $0x1d0] sm:$0xff]
        %v306 = vld [vmem:[%s217 + $0x1d8] sm:$0xff]
        %v307 = vld [vmem:[%s217 + $0x1e0] sm:$0xff]
        %v308 = vld [vmem:[%s217 + $0x1e8] sm:$0xff]
        %v309 = vld [vmem:[%s217 + $0x1f0] sm:$0xff]
        %v310 = vld [vmem:[%s217 + $0x1f8] sm:$0xff]
        %v375 = vunpack.c.l.b16 %v247
        %v376 = vunpack.c.h.b16 %v247
        %v377 = vunpack.c.l.b16 %v248
        %v378 = vunpack.c.h.b16 %v248
        %v379 = vunpack.c.l.b16 %v249
        %v380 = vunpack.c.h.b16 %v249
        %v381 = vunpack.c.l.b16 %v250
        %v382 = vunpack.c.h.b16 %v250
        %v383 = vunpack.c.l.b16 %v251
        %v384 = vunpack.c.h.b16 %v251
        %v385 = vunpack.c.l.b16 %v252
        %v386 = vunpack.c.h.b16 %v252
        %v387 = vunpack.c.l.b16 %v253
        %v388 = vunpack.c.h.b16 %v253
        %v389 = vunpack.c.l.b16 %v254
        %v390 = vunpack.c.h.b16 %v254
        %v391 = vunpack.c.l.b16 %v255
        %v392 = vunpack.c.h.b16 %v255
        %v393 = vunpack.c.l.b16 %v256
        %v394 = vunpack.c.h.b16 %v256
        %v395 = vunpack.c.l.b16 %v257
        %v396 = vunpack.c.h.b16 %v257
        %v397 = vunpack.c.l.b16 %v258
        %v398 = vunpack.c.h.b16 %v258
        %v399 = vunpack.c.l.b16 %v259
        %v400 = vunpack.c.h.b16 %v259
        %v401 = vunpack.c.l.b16 %v260
        %v402 = vunpack.c.h.b16 %v260
        %v403 = vunpack.c.l.b16 %v261
        %v404 = vunpack.c.h.b16 %v261
        %v405 = vunpack.c.l.b16 %v262
        %v406 = vunpack.c.h.b16 %v262
        %v407 = vunpack.c.l.b16 %v263
        %v408 = vunpack.c.h.b16 %v263
        %v409 = vunpack.c.l.b16 %v264
        %v410 = vunpack.c.h.b16 %v264
        %v411 = vunpack.c.l.b16 %v265
        %v412 = vunpack.c.h.b16 %v265
        %v413 = vunpack.c.l.b16 %v266
        %v414 = vunpack.c.h.b16 %v266
        %v415 = vunpack.c.l.b16 %v267
        %v416 = vunpack.c.h.b16 %v267
        %v417 = vunpack.c.l.b16 %v268
        %v418 = vunpack.c.h.b16 %v268
        %v419 = vunpack.c.l.b16 %v269
        %v420 = vunpack.c.h.b16 %v269
        %v421 = vunpack.c.l.b16 %v270
        %v422 = vunpack.c.h.b16 %v270
        %v423 = vunpack.c.l.b16 %v271
        %v424 = vunpack.c.h.b16 %v271
        %v425 = vunpack.c.l.b16 %v272
        %v426 = vunpack.c.h.b16 %v272
        %v427 = vunpack.c.l.b16 %v273
        %v428 = vunpack.c.h.b16 %v273
        %v429 = vunpack.c.l.b16 %v274
        %v430 = vunpack.c.h.b16 %v274
        %v431 = vunpack.c.l.b16 %v275
        %v432 = vunpack.c.h.b16 %v275
        %v433 = vunpack.c.l.b16 %v276
        %v434 = vunpack.c.h.b16 %v276
        %v435 = vunpack.c.l.b16 %v277
        %v436 = vunpack.c.h.b16 %v277
        %v437 = vunpack.c.l.b16 %v278
        %v438 = vunpack.c.h.b16 %v278
        %v439 = vunpack.c.l.b16 %v279
        %v440 = vunpack.c.h.b16 %v279
        %v441 = vunpack.c.l.b16 %v280
        %v442 = vunpack.c.h.b16 %v280
        %v443 = vunpack.c.l.b16 %v281
        %v444 = vunpack.c.h.b16 %v281
        %v445 = vunpack.c.l.b16 %v282
        %v446 = vunpack.c.h.b16 %v282
        %v447 = vunpack.c.l.b16 %v283
        %v448 = vunpack.c.h.b16 %v283
        %v449 = vunpack.c.l.b16 %v284
        %v450 = vunpack.c.h.b16 %v284
        %v451 = vunpack.c.l.b16 %v285
        %v452 = vunpack.c.h.b16 %v285
        %v453 = vunpack.c.l.b16 %v286
        %v454 = vunpack.c.h.b16 %v286
        %v455 = vunpack.c.l.b16 %v287
        %v456 = vunpack.c.h.b16 %v287
        %v457 = vunpack.c.l.b16 %v288
        %v458 = vunpack.c.h.b16 %v288
        %v459 = vunpack.c.l.b16 %v289
        %v460 = vunpack.c.h.b16 %v289
        %v461 = vunpack.c.l.b16 %v290
        %v462 = vunpack.c.h.b16 %v290
        %v463 = vunpack.c.l.b16 %v291
        %v464 = vunpack.c.h.b16 %v291
        %v465 = vunpack.c.l.b16 %v292
        %v466 = vunpack.c.h.b16 %v292
        %v467 = vunpack.c.l.b16 %v293
        %v468 = vunpack.c.h.b16 %v293
        %v469 = vunpack.c.l.b16 %v294
        %v470 = vunpack.c.h.b16 %v294
        %v471 = vunpack.c.l.b16 %v295
        %v472 = vunpack.c.h.b16 %v295
        %v473 = vunpack.c.l.b16 %v296
        %v474 = vunpack.c.h.b16 %v296
        %v475 = vunpack.c.l.b16 %v297
        %v476 = vunpack.c.h.b16 %v297
        %v477 = vunpack.c.l.b16 %v298
        %v478 = vunpack.c.h.b16 %v298
        %v479 = vunpack.c.l.b16 %v299
        %v480 = vunpack.c.h.b16 %v299
        %v481 = vunpack.c.l.b16 %v300
        %v482 = vunpack.c.h.b16 %v300
        %v483 = vunpack.c.l.b16 %v301
        %v484 = vunpack.c.h.b16 %v301
        %v485 = vunpack.c.l.b16 %v302
        %v486 = vunpack.c.h.b16 %v302
        %v487 = vunpack.c.l.b16 %v303
        %v488 = vunpack.c.h.b16 %v303
        %v489 = vunpack.c.l.b16 %v304
        %v490 = vunpack.c.h.b16 %v304
        %v491 = vunpack.c.l.b16 %v305
        %v492 = vunpack.c.h.b16 %v305
        %v493 = vunpack.c.l.b16 %v306
        %v494 = vunpack.c.h.b16 %v306
        %v495 = vunpack.c.l.b16 %v307
        %v496 = vunpack.c.h.b16 %v307
        %v497 = vunpack.c.l.b16 %v308
        %v498 = vunpack.c.h.b16 %v308
        %v499 = vunpack.c.l.b16 %v309
        %v500 = vunpack.c.h.b16 %v309
        %v501 = vunpack.c.l.b16 %v310
        %v502 = vunpack.c.h.b16 %v310
        %v503 = vpack.c.b16 %v383, %v375
        %v504 = vpack.c.b16 %v384, %v376
        %v505 = vpack.c.b16 %v385, %v377
        %v506 = vpack.c.b16 %v386, %v378
        %v507 = vpack.c.b16 %v387, %v379
        %v508 = vpack.c.b16 %v388, %v380
        %v509 = vpack.c.b16 %v389, %v381
        %v510 = vpack.c.b16 %v390, %v382
        %v511 = vpack.c.b16 %v399, %v391
        %v512 = vpack.c.b16 %v400, %v392
        %v513 = vpack.c.b16 %v401, %v393
        %v514 = vpack.c.b16 %v402, %v394
        %v515 = vpack.c.b16 %v403, %v395
        %v516 = vpack.c.b16 %v404, %v396
        %v517 = vpack.c.b16 %v405, %v397
        %v518 = vpack.c.b16 %v406, %v398
        %v519 = vpack.c.b16 %v415, %v407
        %v520 = vpack.c.b16 %v416, %v408
        %v521 = vpack.c.b16 %v417, %v409
        %v522 = vpack.c.b16 %v418, %v410
        %v523 = vpack.c.b16 %v419, %v411
        %v524 = vpack.c.b16 %v420, %v412
        %v525 = vpack.c.b16 %v421, %v413
        %v526 = vpack.c.b16 %v422, %v414
        %v527 = vpack.c.b16 %v431, %v423
        %v528 = vpack.c.b16 %v432, %v424
        %v529 = vpack.c.b16 %v433, %v425
        %v530 = vpack.c.b16 %v434, %v426
        %v531 = vpack.c.b16 %v435, %v427
        %v532 = vpack.c.b16 %v436, %v428
        %v533 = vpack.c.b16 %v437, %v429
        %v534 = vpack.c.b16 %v438, %v430
        %v535 = vpack.c.b16 %v447, %v439
        %v536 = vpack.c.b16 %v448, %v440
        %v537 = vpack.c.b16 %v449, %v441
        %v538 = vpack.c.b16 %v450, %v442
        %v539 = vpack.c.b16 %v451, %v443
        %v540 = vpack.c.b16 %v452, %v444
        %v541 = vpack.c.b16 %v453, %v445
        %v542 = vpack.c.b16 %v454, %v446
        %v543 = vpack.c.b16 %v463, %v455
        %v544 = vpack.c.b16 %v464, %v456
        %v545 = vpack.c.b16 %v465, %v457
        %v546 = vpack.c.b16 %v466, %v458
        %v547 = vpack.c.b16 %v467, %v459
        %v548 = vpack.c.b16 %v468, %v460
        %v549 = vpack.c.b16 %v469, %v461
        %v550 = vpack.c.b16 %v470, %v462
        %v551 = vpack.c.b16 %v479, %v471
        %v552 = vpack.c.b16 %v480, %v472
        %v553 = vpack.c.b16 %v481, %v473
        %v554 = vpack.c.b16 %v482, %v474
        %v555 = vpack.c.b16 %v483, %v475
        %v556 = vpack.c.b16 %v484, %v476
        %v557 = vpack.c.b16 %v485, %v477
        %v558 = vpack.c.b16 %v486, %v478
        %v559 = vpack.c.b16 %v495, %v487
        %v560 = vpack.c.b16 %v496, %v488
        %v561 = vpack.c.b16 %v497, %v489
        %v562 = vpack.c.b16 %v498, %v490
        %v563 = vpack.c.b16 %v499, %v491
        %v564 = vpack.c.b16 %v500, %v492
        %v565 = vpack.c.b16 %v501, %v493
        %v566 = vpack.c.b16 %v502, %v494
        %631 = vmatprep.subr.bf16.mxu0 %v504
        %632 = vmatpush1.bf16.msra.mxu0 %v503
        %633 = vmatprep.subr.bf16.mxu0 %v512
        %634 = vmatpush1.bf16.msra.mxu0 %v511
        %635 = vmatprep.subr.bf16.mxu0 %v520
        %636 = vmatpush1.bf16.msra.mxu0 %v519
        %637 = vmatprep.subr.bf16.mxu0 %v528
        %638 = vmatpush1.bf16.msra.mxu0 %v527
        %639 = vmatprep.subr.bf16.mxu0 %v536
        %640 = vmatpush1.bf16.msra.mxu0 %v535
        %641 = vmatprep.subr.bf16.mxu0 %v544
        %642 = vmatpush1.bf16.msra.mxu0 %v543
        %643 = vmatprep.subr.bf16.mxu0 %v552
        %644 = vmatpush1.bf16.msra.mxu0 %v551
        %645 = vmatprep.subr.bf16.mxu0 %v560
        %646 = vmatpush1.bf16.msra.mxu0 %v559
        %647 = vmatprep.subr.bf16.mxu0 0
        %648 = vmatpush1.bf16.msra.mxu0 0
        %649 = vmatprep.subr.bf16.mxu0 0
        %650 = vmatpush1.bf16.msra.mxu0 0
        %651 = vmatprep.subr.bf16.mxu0 0
        %652 = vmatpush1.bf16.msra.mxu0 0
        %653 = vmatprep.subr.bf16.mxu0 0
        %654 = vmatpush1.bf16.msra.mxu0 0
        %655 = vmatprep.subr.bf16.mxu0 0
        %656 = vmatpush1.bf16.msra.mxu0 0
        %657 = vmatprep.subr.bf16.mxu0 0
        %658 = vmatpush1.bf16.msra.mxu0 0
        %659 = vmatprep.subr.bf16.mxu0 0
        %660 = vmatpush1.bf16.msra.mxu0 0
        %661 = vmatprep.subr.bf16.mxu0 0
        %662 = vmatpush1.bf16.msra.mxu0 0
        %663 = vmatprep.mubr.bf16.mxu0 0
        %664 = vmatmul.mubr.bf16.gmra.mrb[0].mxu0 %v246
        %v665 = vpop.f32.mrb[0].mxu0
        %v666 = vadd.f32 0.0, %v665
        %v667 = vpop.f32.mrb[0].mxu0
        %v668 = vadd.f32 0.0, %v667
        %v669 = vpop.f32.mrb[0].mxu0
        %v670 = vpop.f32.mrb[0].mxu0
        %671 = vdwg.mxu0
        %672 = vmatprep.subr.bf16.mxu0 %v506
        %673 = vmatpush1.bf16.msra.mxu0 %v505
        %674 = vmatprep.subr.bf16.mxu0 %v514
        %675 = vmatpush1.bf16.msra.mxu0 %v513
        %676 = vmatprep.subr.bf16.mxu0 %v522
        %677 = vmatpush1.bf16.msra.mxu0 %v521
        %678 = vmatprep.subr.bf16.mxu0 %v530
        %679 = vmatpush1.bf16.msra.mxu0 %v529
        %680 = vmatprep.subr.bf16.mxu0 %v538
        %681 = vmatpush1.bf16.msra.mxu0 %v537
        %682 = vmatprep.subr.bf16.mxu0 %v546
        %683 = vmatpush1.bf16.msra.mxu0 %v545
        %684 = vmatprep.subr.bf16.mxu0 %v554
        %685 = vmatpush1.bf16.msra.mxu0 %v553
        %686 = vmatprep.subr.bf16.mxu0 %v562
        %687 = vmatpush1.bf16.msra.mxu0 %v561
        %688 = vmatprep.subr.bf16.mxu0 0
        %689 = vmatpush1.bf16.msra.mxu0 0
        %690 = vmatprep.subr.bf16.mxu0 0
        %691 = vmatpush1.bf16.msra.mxu0 0
        %692 = vmatprep.subr.bf16.mxu0 0
        %693 = vmatpush1.bf16.msra.mxu0 0
        %694 = vmatprep.subr.bf16.mxu0 0
        %695 = vmatpush1.bf16.msra.mxu0 0
        %696 = vmatprep.subr.bf16.mxu0 0
        %697 = vmatpush1.bf16.msra.mxu0 0
        %698 = vmatprep.subr.bf16.mxu0 0
        %699 = vmatpush1.bf16.msra.mxu0 0
        %700 = vmatprep.subr.bf16.mxu0 0
        %701 = vmatpush1.bf16.msra.mxu0 0
        %702 = vmatprep.subr.bf16.mxu0 0
        %703 = vmatpush1.bf16.msra.mxu0 0
        %704 = vmatprep.mubr.bf16.mxu0 0
        %705 = vmatmul.mubr.bf16.gmra.mrb[0].mxu0 %v246
        %v706 = vpop.f32.mrb[0].mxu0
        %v707 = vadd.f32 0.0, %v706
        %v708 = vpop.f32.mrb[0].mxu0
        %v709 = vadd.f32 0.0, %v708
        %v710 = vpop.f32.mrb[0].mxu0
        %v711 = vpop.f32.mrb[0].mxu0
        %712 = vdwg.mxu0
        %713 = vmatprep.subr.bf16.mxu0 %v508
        %714 = vmatpush1.bf16.msra.mxu0 %v507
        %715 = vmatprep.subr.bf16.mxu0 %v516
        %716 = vmatpush1.bf16.msra.mxu0 %v515
        %717 = vmatprep.subr.bf16.mxu0 %v524
        %718 = vmatpush1.bf16.msra.mxu0 %v523
        %719 = vmatprep.subr.bf16.mxu0 %v532
        %720 = vmatpush1.bf16.msra.mxu0 %v531
        %721 = vmatprep.subr.bf16.mxu0 %v540
        %722 = vmatpush1.bf16.msra.mxu0 %v539
        %723 = vmatprep.subr.bf16.mxu0 %v548
        %724 = vmatpush1.bf16.msra.mxu0 %v547
        %725 = vmatprep.subr.bf16.mxu0 %v556
        %726 = vmatpush1.bf16.msra.mxu0 %v555
        %727 = vmatprep.subr.bf16.mxu0 %v564
        %728 = vmatpush1.bf16.msra.mxu0 %v563
        %729 = vmatprep.subr.bf16.mxu0 0
        %730 = vmatpush1.bf16.msra.mxu0 0
        %731 = vmatprep.subr.bf16.mxu0 0
        %732 = vmatpush1.bf16.msra.mxu0 0
        %733 = vmatprep.subr.bf16.mxu0 0
        %734 = vmatpush1.bf16.msra.mxu0 0
        %735 = vmatprep.subr.bf16.mxu0 0
        %736 = vmatpush1.bf16.msra.mxu0 0
        %737 = vmatprep.subr.bf16.mxu0 0
        %738 = vmatpush1.bf16.msra.mxu0 0
        %739 = vmatprep.subr.bf16.mxu0 0
        %740 = vmatpush1.bf16.msra.mxu0 0
        %741 = vmatprep.subr.bf16.mxu0 0
        %742 = vmatpush1.bf16.msra.mxu0 0
        %743 = vmatprep.subr.bf16.mxu0 0
        %744 = vmatpush1.bf16.msra.mxu0 0
        %745 = vmatprep.mubr.bf16.mxu0 0
        %746 = vmatmul.mubr.bf16.gmra.mrb[0].mxu0 %v246
        %v747 = vpop.f32.mrb[0].mxu0
        %v748 = vadd.f32 0.0, %v747
        %v749 = vpop.f32.mrb[0].mxu0
        %v750 = vadd.f32 0.0, %v749
        %v751 = vpop.f32.mrb[0].mxu0
        %v752 = vpop.f32.mrb[0].mxu0
        %753 = vdwg.mxu0
        %754 = vmatprep.subr.bf16.mxu0 %v510
        %755 = vmatpush1.bf16.msra.mxu0 %v509
        %756 = vmatprep.subr.bf16.mxu0 %v518
        %757 = vmatpush1.bf16.msra.mxu0 %v517
        %758 = vmatprep.subr.bf16.mxu0 %v526
        %759 = vmatpush1.bf16.msra.mxu0 %v525
        %760 = vmatprep.subr.bf16.mxu0 %v534
        %761 = vmatpush1.bf16.msra.mxu0 %v533
        %762 = vmatprep.subr.bf16.mxu0 %v542
        %763 = vmatpush1.bf16.msra.mxu0 %v541
        %764 = vmatprep.subr.bf16.mxu0 %v550
        %765 = vmatpush1.bf16.msra.mxu0 %v549
        %766 = vmatprep.subr.bf16.mxu0 %v558
        %767 = vmatpush1.bf16.msra.mxu0 %v557
        %768 = vmatprep.subr.bf16.mxu0 %v566
        %769 = vmatpush1.bf16.msra.mxu0 %v565
        %770 = vmatprep.subr.bf16.mxu0 0
        %771 = vmatpush1.bf16.msra.mxu0 0
        %772 = vmatprep.subr.bf16.mxu0 0
        %773 = vmatpush1.bf16.msra.mxu0 0
        %774 = vmatprep.subr.bf16.mxu0 0
        %775 = vmatpush1.bf16.msra.mxu0 0
        %776 = vmatprep.subr.bf16.mxu0 0
        %777 = vmatpush1.bf16.msra.mxu0 0
        %778 = vmatprep.subr.bf16.mxu0 0
        %779 = vmatpush1.bf16.msra.mxu0 0
        %780 = vmatprep.subr.bf16.mxu0 0
        %781 = vmatpush1.bf16.msra.mxu0 0
        %782 = vmatprep.subr.bf16.mxu0 0
        %783 = vmatpush1.bf16.msra.mxu0 0
        %784 = vmatprep.subr.bf16.mxu0 0
        %785 = vmatpush1.bf16.msra.mxu0 0
        %786 = vmatprep.mubr.bf16.mxu0 0
        %787 = vmatmul.mubr.bf16.gmra.mrb[0].mxu0 %v246
        %v788 = vpop.f32.mrb[0].mxu0
        %v789 = vadd.f32 0.0, %v788
        %v790 = vpop.f32.mrb[0].mxu0
        %v791 = vadd.f32 0.0, %v790
        %v792 = vpop.f32.mrb[0].mxu0
        %v793 = vpop.f32.mrb[0].mxu0
        %794 = vdwg.mxu0
        %795 = vst [vmem:[%s239] sm:$0xff] %v666
        %796 = vst [vmem:[%s239 + $0x8] sm:$0xff] %v668
        %797 = vst [vmem:[%s239 + $0x10] sm:$0xff] %v707
        %798 = vst [vmem:[%s239 + $0x18] sm:$0xff] %v709
        %799 = vst [vmem:[%s239 + $0x20] sm:$0xff] %v748
        %800 = vst [vmem:[%s239 + $0x28] sm:$0xff] %v750
        %801 = vst [vmem:[%s239 + $0x30] sm:$0xff] %v789
        %802 = vst [vmem:[%s239 + $0x38] sm:$0xff] %v791
        %s803 = sand.u32 %s119, 1
        %s804 = scalar_lea.sflag [#allocation4], %s803
        %s805 = sand.u32 %s119, 1
        %s806 = smul.addr %s805, 64
        %s807 = scalar_lea.vmem [#allocation8], %s806
        // Predicated region
        $region45: #{tpu_custom_call.1} parent=31 // pred_check
          %p808 = pneg %p129
        $region46: #{tpu_custom_call.1} parent=31 // pred_check_branch
          %810 = sbr.rel (%p808) target = $region48
        $region47: #{tpu_custom_call.1} parent=31 // pred_region
          %s811 = smul.u32 8, %s24
          %s813 = ssub.s32 1024, 1024
          %814 = vsyncadd %s804, %s813
          %s815 = smul.addr %s23, 32
          %s816 = sadd.s32 %s811, %s815
          %s817 = smul.addr %s816, 128
          %s818 = scalar_lea.hbm %s3, %s817
          %s820 = sshll.u32 %s807, 4
          %s821 = int_to_ptr.vmem [resolvable:$true] %s820
          %823 = dma.vmem_to_hbm [thread:$0]  %s821, 1024, %s818, %s804
        $region48: #{tpu_custom_call.1} parent=31 // pred_fallthru
          _
      $region32: #{tpu_custom_call.1} parent=5 // pred_fallthru
        _
      %p824 = scmp.le.s32.totalorder 2, %s14
      // Predicated region
      $region49: #{tpu_custom_call.1} parent=5 // pred_check
        %p825 = pneg %p824
      $region50: #{tpu_custom_call.1} parent=5 // pred_check_branch
        %827 = sbr.rel (%p825) target = $region52
      $region51: #{tpu_custom_call.1} parent=5 // pred_region
        %s828 = ssub.s32 %s14, 2
        // Predicated region
        $region53: #{tpu_custom_call.1} parent=51 // pred_check
          %p829 = pneg %p135
        $region54: #{tpu_custom_call.1} parent=51 // pred_check_branch
          %831 = sbr.rel (%p829) target = $region56
        $region55: #{tpu_custom_call.1} parent=51 // pred_region
          %s832 = sand.u32 %s120, 1
          %s833 = scalar_lea.sflag [#allocation4], %s832
          %s834 = sand.u32 %s120, 1
          %s835 = smul.addr %s834, 64
          %s836 = scalar_lea.vmem [#allocation8], %s835
          %837 = dma.done %s833, 1024
        $region56: #{tpu_custom_call.1} parent=51 // pred_fallthru
          _
      $region52: #{tpu_custom_call.1} parent=5 // pred_fallthru
        _
    $region6: #{tpu_custom_call.1} parent=1 // loop_footer
      %s18 = sadd.s32 1, %s14
    $region7: #{tpu_custom_call.1} parent=1 // loop_footer_branch
      %13 = sbr.rel target = $region3
    $region8: #{tpu_custom_call.1} parent=1 // loop_exit
      _
    %838 = vsyncpa [#allocation3], 1
    %s839 = scalar_lea.sflag [#allocation3], 1
    %840 = vsyncpa %s839, 1
    %841 = vsyncpa [#allocation6], 1
    %842 = vsyncpa [#allocation4], 1
    %s843 = scalar_lea.sflag [#allocation4], 1
    %844 = vsyncpa %s843, 1

</llo_original>
